<compile_context>
chip_gen: v5e
topology: v5e:2x2
jax: 0.10.0
libtpu: 0.0.40
codegen_flags: <defaults>
</compile_context>

<pallas_src>
import jax
import jax.numpy as jnp
from jax.experimental import pallas as pl
from jax.experimental.pallas import tpu as pltpu

_LANE = 128


def _pos_enc_kernel(x_ref, emb_ref, o_ref):
    # x_ref/o_ref: (tile_r, tile_c) lane-dense slab; emb_ref: (1, tile_c).
    # Single full-width VPU add with implicit sublane broadcast of the emb row.
    o_ref[...] = x_ref[...].astype(o_ref.dtype) + emb_ref[...]


def _sublane_multiple(dtype):
    """Native row packing: 8 for 32-bit, 16 for bf16/f16, 32 for int8/fp8."""
    return max(8, 32 // jnp.dtype(dtype).itemsize)


def _vmem_capacity_bytes():
    try:
        return int(pltpu.get_tpu_info().vmem_capacity_bytes)
    except Exception:
        return 64 * 1024 * 1024  # conservative: v7x per-TensorCore VMEM


def _choose_tiles(num_rows, num_cols, row_mult, elem_bytes, per_buf_bytes):
    """Pick (tile_r, tile_c).

    tile_r is the full row extent or a multiple of `row_mult`; tile_c is the
    full column extent or a multiple of 128 lanes.  Each block stays under
    `per_buf_bytes` so the double-buffered pipeline fits the VMEM budget.
    """
    full_row_bytes = num_cols * elem_bytes
    if num_rows * full_row_bytes <= per_buf_bytes:
        return num_rows, num_cols  # whole array in one block
    if row_mult * full_row_bytes <= per_buf_bytes:
        # Row tiling only: as many full rows as fit, rounded to packing.
        tr = (per_buf_bytes // full_row_bytes // row_mult) * row_mult
        tr = max(row_mult, min(tr, num_rows))
        return tr, num_cols
    # Rows are huge: minimal row footprint + column tiling (multiple of 128).
    tr = min(num_rows, row_mult)
    tc = (per_buf_bytes // (tr * elem_bytes) // _LANE) * _LANE
    tc = max(_LANE, min(tc, num_cols))
    return tr, tc


def positional_encoding_forward(x, emb_table, batched=True, *,
                                min_kernel_bytes=256 * 1024):
    """Reproduces PositionalEncoding.forward.

    :param x: [batch, seq, d_model] if batched else [seq, d_model]
    :param emb_table: [num_positions, d_model]  (requires seq <= num_positions)
    :param min_kernel_bytes: below this total size, skip pallas_call and let
        XLA fuse the add (launch overhead dominates at tiny scales).
    """
    squeeze_out = False
    if not batched:
        x = x[None, ...]
        squeeze_out = True

    B, S, D = x.shape
    C = S * D
    out_dtype = jnp.promote_types(x.dtype, emb_table.dtype)

    emb_row = emb_table[:S, :].astype(out_dtype)  # static slice, tiny table

    # Small-input fast path: a fused XLA broadcast-add beats kernel launch.
    total_bytes = B * C * max(jnp.dtype(x.dtype).itemsize,
                              jnp.dtype(out_dtype).itemsize)
    if total_bytes < min_kernel_bytes:
        out = x.astype(out_dtype) + emb_row[None, :, :]
        return out[0] if squeeze_out else out

    # Lane-dense flatten + pad C up to a multiple of 128 for unmasked stores.
    C_pad = ((C + _LANE - 1) // _LANE) * _LANE
    x2 = x.reshape(B, C)
    emb2 = emb_row.reshape(1, C)
    if C_pad != C:
        x2 = jnp.pad(x2, ((0, 0), (0, C_pad - C)))
        emb2 = jnp.pad(emb2, ((0, 0), (0, C_pad - C)))

    x_item = jnp.dtype(x.dtype).itemsize
    out_item = jnp.dtype(out_dtype).itemsize
    emb_item = out_item

    # Generation-aware VMEM budget: ~half of physical VMEM for this call,
    # ~75% of that split across the 4 big double-buffered blocks, <= 8 MiB each.
    vmem_cap = _vmem_capacity_bytes()
    vmem_limit = min(vmem_cap // 2, 64 * 1024 * 1024)
    per_buf = min(8 * 1024 * 1024, (vmem_limit * 3 // 4) // 4)

    row_mult = max(_sublane_multiple(x.dtype), _sublane_multiple(out_dtype))
    tile_r, tile_c = _choose_tiles(B, C_pad, row_mult,
                                   max(x_item, out_item), per_buf)
    grid_r = pl.cdiv(B, tile_r)
    grid_c = pl.cdiv(C_pad, tile_c)

    cost = pl.CostEstimate(
        flops=B * C_pad,
        transcendentals=0,
        bytes_accessed=B * C_pad * (x_item + out_item) + C_pad * emb_item,
    )

    # TODO(synk): input_output_aliases={0: 0} would save an HBM allocation when
    # callers do not reuse x and dtypes match; skipped to avoid clobbering x.
    out2 = pl.pallas_call(
        _pos_enc_kernel,
        out_shape=jax.ShapeDtypeStruct((B, C_pad), out_dtype),
        grid_spec=pltpu.PrefetchScalarGridSpec(
            num_scalar_prefetch=0,
            grid=(grid_r, grid_c),
            in_specs=[
                pl.BlockSpec((tile_r, tile_c), lambda r, c: (r, c)),
                pl.BlockSpec((1, tile_c), lambda r, c: (0, c)),  # emb row
            ],
            out_specs=pl.BlockSpec((tile_r, tile_c), lambda r, c: (r, c)),
        ),
        compiler_params=pltpu.CompilerParams(
            dimension_semantics=("parallel", "parallel"),
            vmem_limit_bytes=vmem_limit,
        ),
        cost_estimate=cost,
    )(x2, emb2)

    out = out2[:, :C].reshape(B, S, D)
    if squeeze_out:
        out = out[0]
    return out


if __name__ == "__main__":
    key = jax.random.PRNGKey(0)
    k_emb, k_x, k_x2, k_x3 = jax.random.split(key, 4)

    d_model = 32
    num_positions = 20
    batch, seq = 2, 8

    # nn.Embedding default init: N(0, 1)
    emb_table = jax.random.normal(k_emb, (num_positions, d_model),
                                  dtype=jnp.float32)

    # Batched case: [batch, seq, d_model]  (min_kernel_bytes=0 forces the
    # Pallas path so the kernel itself is exercised at demo scale).
    x_batched = jax.random.normal(k_x, (batch, seq, d_model), dtype=jnp.float32)
    out_b = positional_encoding_forward(x_batched, emb_table, batched=True,
                                        min_kernel_bytes=0)
    out_b = jax.block_until_ready(out_b)
    ref_b = x_batched + emb_table[:seq][None, :, :]
    assert out_b.shape == x_batched.shape
    assert jnp.allclose(out_b, ref_b, atol=1e-6), "batched mismatch"

    # Non-batched case: [seq, d_model]
    x_unbatched = jax.random.normal(k_x2, (seq, d_model), dtype=jnp.float32)
    out_u = positional_encoding_forward(x_unbatched, emb_table, batched=False,
                                        min_kernel_bytes=0)
    out_u = jax.block_until_ready(out_u)
    ref_u = x_unbatched + emb_table[:seq]
    assert out_u.shape == x_unbatched.shape
    assert jnp.allclose(out_u, ref_u, atol=1e-6), "non-batched mismatch"

    # Non-128-multiple lane width: exercises the C padding / slice-back path.
    d_odd = 33
    emb_odd = jax.random.normal(k_emb, (num_positions, d_odd), dtype=jnp.float32)
    x_odd = jax.random.normal(k_x3, (batch, seq, d_odd), dtype=jnp.float32)
    out_o = positional_encoding_forward(x_odd, emb_odd, batched=True,
                                        min_kernel_bytes=0)
    out_o = jax.block_until_ready(out_o)
    ref_o = x_odd + emb_odd[:seq][None, :, :]
    assert out_o.shape == x_odd.shape
    assert jnp.allclose(out_o, ref_o, atol=1e-6), "padded-lane mismatch"

    print("KERNEL_OK")
</pallas_src>

<mosaic_0001>
module attributes {stable_mosaic.version = 11 : i64} {
  func.func @_pos_enc_kernel(%arg0: i32, %arg1: i32, %arg2: memref<2x256xf32, #tpu.memory_space<vmem>>, %arg3: memref<1x256xf32, #tpu.memory_space<vmem>>, %arg4: memref<2x256xf32, #tpu.memory_space<vmem>>) attributes {dimension_semantics = [#tpu.dimension_semantics<parallel>, #tpu.dimension_semantics<parallel>], iteration_bounds = array<i64: 1, 1>, scalar_prefetch = 0 : i64, scratch_operands = 0 : i64, tpu.core_type = #tpu.core_type<tc>, window_params = [{transform_indices = @transform_0, window_bounds = array<i64: 2, 256>}, {transform_indices = @transform_1, window_bounds = array<i64: 1, 256>}, {transform_indices = @transform_2, window_bounds = array<i64: 2, 256>}]} {
    %c0 = arith.constant 0 : index
    %c0_0 = arith.constant 0 : index
    %0 = vector.load %arg2[%c0, %c0_0] : memref<2x256xf32, #tpu.memory_space<vmem>>, vector<2x256xf32>
    %c0_1 = arith.constant 0 : index
    %c0_2 = arith.constant 0 : index
    %1 = vector.load %arg3[%c0_1, %c0_2] : memref<1x256xf32, #tpu.memory_space<vmem>>, vector<1x256xf32>
    %2 = vector.broadcast %1 : vector<1x256xf32> to vector<2x256xf32>
    %3 = arith.addf %0, %2 : vector<2x256xf32>
    %c0_3 = arith.constant 0 : index
    %c0_4 = arith.constant 0 : index
    %4 = vector.load %arg4[%c0_3, %c0_4] : memref<2x256xf32, #tpu.memory_space<vmem>>, vector<2x256xf32>
    tpu.vector_store %arg4[%c0_3, %c0_4], %3 {strides = array<i32>} : memref<2x256xf32, #tpu.memory_space<vmem>>, vector<2x256xf32>,
    return
  }
  func.func @transform_0(%arg0: i32, %arg1: i32) -> (i32, i32) {
    %c0_i32 = arith.constant 0 : i32
    return %arg0, %arg1 : i32, i32
  }
  func.func @transform_1(%arg0: i32, %arg1: i32) -> (i32, i32) {
    %c0_i32 = arith.constant 0 : i32
    %c0_i32_0 = arith.constant 0 : i32
    return %c0_i32, %arg1 : i32, i32
  }
  func.func @transform_2(%arg0: i32, %arg1: i32) -> (i32, i32) {
    %c0_i32 = arith.constant 0 : i32
    return %arg0, %arg1 : i32, i32
  }
}

</mosaic_0001>

<llo_original>
// kernel: tpu_custom_call.1
$region0: #{tpu_custom_call.1}
  #allocation0 [shape = 'u32[]', space=smem, size = 0x4, offset = 0x4, fixed_abs, tag = 'smem constant byte address 0x4 - core index']
  #allocation1 [shape = 'u32[72,128]{1,0:T(1,128)}', space=vmem, size = 0x9000, scoped, tag = 'internal scratch']
  %s0 = inlined_call_operand.hbm [shape: f32[2,256], index: 0, kind: input, shape index: {}]
  %s1 = inlined_call_operand.hbm [shape: f32[1,256], index: 1, kind: input, shape index: {}]
  %s2 = inlined_call_operand.hbm [shape: f32[2,256], index: 2, kind: output, shape index: {}]
  %s3 = sld [smem:[#allocation0]]
  $region26: #{tpu_custom_call.1} parent=0
    _
  %s5 = ssub.s32 1, %s3
  %s6 = scalar_select 0, %s5, %s3
  $region1: #{tpu_custom_call.1} parent=0
    #allocation2 [shape = 'u8[2048]{0}', space=vmem, size = 0x800, scoped, tag = 'input window, operand 0, single buffered']
    #allocation3 [shape = 's32[1]{0}', space=sflag, size = 0x4, scoped, tag = 'scoped memory for tpu_custom_call.1']
    #allocation4 [shape = 's32[1]{0}', space=sflag, size = 0x4, scoped, tag = 'scoped memory for tpu_custom_call.1']
    #allocation5 [shape = 'u8[1024]{0}', space=vmem, size = 0x400, scoped, tag = 'input window, operand 1, single buffered']
    #allocation6 [shape = 's32[1]{0}', space=sflag, size = 0x4, scoped, tag = 'scoped memory for tpu_custom_call.1']
    #allocation7 [shape = 'u8[2048]{0}', space=vmem, size = 0x800, scoped, tag = 'output window, operand 0, single buffered']
    %7 = vsyncpa [#allocation3], 0
    %8 = vsyncpa [#allocation6], 0
    %9 = vsyncpa [#allocation4], 0
    // Predicated region
    $region2: #{tpu_custom_call.1} parent=1 // pred_check
      _
    $region3: #{tpu_custom_call.1} parent=1 // pred_check_branch
      %11 = sbr.rel (0) target = $region5
    $region4: #{tpu_custom_call.1} parent=1 // pred_region
      %13 = vsyncadd [#allocation3], 0
      %s15 = sshll.u32 %s0, 4
      %s16 = int_to_ptr.hbm [resolvable:$true] %s15
      %s17 = sshll.u32 [#allocation2], 4
      %s18 = int_to_ptr.vmem [resolvable:$true] %s17
      %20 = dma.hbm_to_vmem [thread:$0]  %s16, 64, %s18, [#allocation3]
    $region5: #{tpu_custom_call.1} parent=1 // pred_fallthru
      _
    // Predicated region
    $region6: #{tpu_custom_call.1} parent=1 // pred_check
      _
    $region7: #{tpu_custom_call.1} parent=1 // pred_check_branch
      %22 = sbr.rel (0) target = $region9
    $region8: #{tpu_custom_call.1} parent=1 // pred_region
      %24 = vsyncadd [#allocation6], 0
      %s26 = sshll.u32 %s1, 4
      %s27 = int_to_ptr.hbm [resolvable:$true] %s26
      %s28 = sshll.u32 [#allocation5], 4
      %s29 = int_to_ptr.vmem [resolvable:$true] %s28
      %31 = dma.hbm_to_vmem [thread:$0]  %s27, 32, %s29, [#allocation6]
    $region9: #{tpu_custom_call.1} parent=1 // pred_fallthru
      _
    // Predicated region
    $region10: #{tpu_custom_call.1} parent=1 // pred_check
      _
    $region11: #{tpu_custom_call.1} parent=1 // pred_check_branch
      %33 = sbr.rel (0) target = $region13
    $region12: #{tpu_custom_call.1} parent=1 // pred_region
      %35 = dma.done [#allocation3], 64
    $region13: #{tpu_custom_call.1} parent=1 // pred_fallthru
      _
    // Predicated region
    $region14: #{tpu_custom_call.1} parent=1 // pred_check
      _
    $region15: #{tpu_custom_call.1} parent=1 // pred_check_branch
      %37 = sbr.rel (0) target = $region17
    $region16: #{tpu_custom_call.1} parent=1 // pred_region
      %39 = dma.done [#allocation6], 32
    $region17: #{tpu_custom_call.1} parent=1 // pred_fallthru
      _
    %v40 = vld [vmem:[#allocation2] sm:$0xf]
    %v41 = vld [vmem:[#allocation5] sm:$0x3]
    %v43 = vperm.slane %v41, 0
    %v44 = vperm.slane %v41, 1
    %v45 = vrot.slane %v44, 6
    %vm46 = vcmask 1041408
    %v47 = vsel %vm46, %v43, %v45
    %v49 = vadd.f32 %v40, %v47
    %50 = vst [vmem:[#allocation7] sm:$0xf] %v49
    // Predicated region
    $region18: #{tpu_custom_call.1} parent=1 // pred_check
      _
    $region19: #{tpu_custom_call.1} parent=1 // pred_check_branch
      %52 = sbr.rel (0) target = $region21
    $region20: #{tpu_custom_call.1} parent=1 // pred_region
      %54 = vsyncadd [#allocation4], 0
      %s56 = sshll.u32 [#allocation7], 4
      %s57 = int_to_ptr.vmem [resolvable:$true] %s56
      %s58 = sshll.u32 %s2, 4
      %s59 = int_to_ptr.hbm [resolvable:$true] %s58
      %61 = dma.vmem_to_hbm [thread:$0]  %s57, 64, %s59, [#allocation4]
    $region21: #{tpu_custom_call.1} parent=1 // pred_fallthru
      _
    // Predicated region
    $region22: #{tpu_custom_call.1} parent=1 // pred_check
      _
    $region23: #{tpu_custom_call.1} parent=1 // pred_check_branch
      %63 = sbr.rel (0) target = $region25
    $region24: #{tpu_custom_call.1} parent=1 // pred_region
      %65 = dma.done [#allocation4], 64
    $region25: #{tpu_custom_call.1} parent=1 // pred_fallthru
      _
    %66 = vsyncpa [#allocation3], 1
    %67 = vsyncpa [#allocation6], 1
    %68 = vsyncpa [#allocation4], 1

</llo_original>
